<compile_context>
chip_gen: v7x
topology: tpu7x:2x2x1
jax: 0.10.0
libtpu: 0.0.40
codegen_flags: <defaults>
</compile_context>

<pallas_src>
import jax
import jax.numpy as jnp
from jax.experimental import pallas as pl
from jax.experimental.pallas import tpu as pltpu


def _self_routing_kernel(x_ref, w1t_ref, o_ref):
    """Processes Bb batch elements per grid step.

    x_ref  : (Bb, I, N)    input capsule poses, lane axis = N (lane dense)
    w1t_ref: (I, K*S)      pose-vote weights (transposed), VMEM-resident
    o_ref  : (1, Bb, K*S)  output poses, lane-dense slab
    """
    x = x_ref[...].astype(jnp.float32)                        # (Bb, I, N)

    # Input-capsule activations a[b, n] = ||x[b, :, n]||_2
    # (sublane reduce over I=8 + EUP sqrt).
    a = jnp.sqrt(jnp.sum(x * x, axis=1, keepdims=True))       # (Bb, 1, N)

    # coeff[b, n] = a[b, n] / sum_n a[b, n].
    # (cij == 1/K exactly because W2/b2 are shared across output capsules, so
    #  the routing softmax cancels -- see module-level comment.)
    # NOTE: like the PyTorch reference, this is 0/0 = NaN if every input norm
    # of a batch element is exactly zero; no epsilon is added to stay faithful.
    denom = jnp.sum(a, axis=2, keepdims=True)                 # (Bb, 1, 1)
    coeff = a * pl.reciprocal(denom, approx=True)             # (Bb, 1, N)

    # Norm-weighted pooling over the N input capsules, done BEFORE the linear
    # W1 vote (exact by linearity since coeff does not depend on (k, s)).
    xw = jnp.sum(x * coeff, axis=2)                           # (Bb, I)

    # Pose vote of the pooled capsule on the MXU:
    # pose[b, k*S + s] = sum_i W1[k, s, i] * xw[b, i]
    pose = jnp.dot(xw, w1t_ref[...].astype(jnp.float32),
                   preferred_element_type=jnp.float32)        # (Bb, K*S)
    o_ref[0] = pose.astype(o_ref.dtype)


def self_routing_2d(x, W1, W2=None, b2=None, *, block_b=None):
    """Pallas forward of SelfRouting2d.

    Args:
      x : (B, in_units, N)  N input capsules of dimension in_units
                            (the torch forward immediately transposes to (B,N,I)).
      W1: (1, 1, num_units, unit_size, in_units)  torch parameter layout.
      W2: (1, 1, 1, unit_size, in_units) -- accepted for API fidelity, but it is
          shared across the K axis over which the routing softmax is taken, so
          it provably cannot affect the output and never enters the kernel.
      b2: (1, 1, 1, unit_size) -- same as W2.
      block_b: batch elements per grid step (must divide B).  Auto-chosen to
          amortize per-step overhead while keeping several grid steps so
          dimension_semantics=("parallel",) can feed both v7x TensorCores.

    Returns:
      pose_out: (B, num_units, unit_size)
    """
    B, in_units, N = x.shape
    _, _, K, S, I = W1.shape
    assert I == in_units, (I, in_units)
    if W2 is not None:
        assert W2.shape == (1, 1, 1, S, in_units), W2.shape
    if b2 is not None:
        assert b2.shape == (1, 1, 1, S), b2.shape

    if block_b is None:
        block_b = 1
        for cand in (16, 8, 4, 2):
            if B % cand == 0 and B // cand >= 4:
                block_b = cand
                break
    assert B % block_b == 0, (B, block_b)
    num_blocks = B // block_b

    # Free metadata reshape + one tiny transpose outside the kernel:
    # (1,1,K,S,I) -> (K*S, I) -> (I, K*S), so the in-kernel vote is a plain
    # (Bb, I) @ (I, K*S) MXU matmul with a lane-dense (K*S = 160 lane) result.
    w1t = jnp.transpose(W1.reshape(K * S, in_units))          # (I, K*S)

    out = pl.pallas_call(
        _self_routing_kernel,
        out_shape=jax.ShapeDtypeStruct((num_blocks, block_b, K * S), x.dtype),
        grid_spec=pltpu.PrefetchScalarGridSpec(
            num_scalar_prefetch=0,
            grid=(num_blocks,),
            in_specs=[
                # Lane-dense (Bb, I, N) batch block; last two dims = full dims.
                pl.BlockSpec((block_b, in_units, N), lambda b: (b, 0, 0)),
                # Small weight with a constant index map -> stays resident in VMEM.
                pl.BlockSpec((in_units, K * S), lambda b: (0, 0)),
            ],
            # Lane-dense (Bb, K*S) output slab per step (unmasked lane stores).
            out_specs=pl.BlockSpec((1, block_b, K * S), lambda b: (b, 0, 0)),
        ),
        compiler_params=pltpu.CompilerParams(
            # Grid steps are independent batch blocks -> megacore (v7x) splits them.
            dimension_semantics=("parallel",),
        ),
    )(x, w1t)

    return out.reshape(B, K, S)


def self_routing_2d_ref(x, W1, W2, b2):
    """Pure-JAX line-for-line port of the PyTorch forward (reference)."""
    B, in_units, N = x.shape
    K, S = W1.shape[2], W1.shape[3]
    xt = jnp.swapaxes(x, 1, 2)                                                # (B, N, I)
    xe = jnp.broadcast_to(xt[:, :, None, :], (B, N, K, in_units))[..., None]  # (B,N,K,I,1)
    u_hat = jnp.matmul(W1, xe)                                                # (B,N,K,S,1)
    logit = jnp.matmul(W2, xe)[..., 0] + b2                                   # (B,N,K,S)
    cij = jax.nn.softmax(logit, axis=2)[..., None]                            # (B,N,K,S,1)
    a = jnp.sqrt(jnp.sum(xe * xe, axis=3, keepdims=True))                     # (B,N,K,1,1)
    ar = a * cij
    ar_sum = jnp.sum(ar, axis=1, keepdims=True)
    coeff = ar / ar_sum
    pose_out = jnp.sum(coeff * u_hat, axis=1)[..., 0]                         # (B,K,S)
    return pose_out


if __name__ == "__main__":
    key = jax.random.PRNGKey(0)
    kx, k1, k2, kb = jax.random.split(key, 4)

    # Small shapes: batch=2, in_units=8 (input capsule dim), a 16x16 grid of
    # input capsules (N=256), num_units=10 output capsules of unit_size=16.
    B, in_units, H, W = 2, 8, 16, 16
    N = H * W
    num_units, unit_size = 10, 16

    x = jax.random.normal(kx, (B, in_units, N), dtype=jnp.float32)
    # Parameters in the torch layout.  The module inits W2/b2 to zero; random
    # values are used here so the (provably inert) logit/softmax path of the
    # full reference is genuinely exercised by the comparison below.
    W1 = jax.random.normal(k1, (1, 1, num_units, unit_size, in_units),
                           dtype=jnp.float32) / (in_units ** 0.5)
    W2 = 0.1 * jax.random.normal(k2, (1, 1, 1, unit_size, in_units), dtype=jnp.float32)
    b2 = 0.1 * jax.random.normal(kb, (1, 1, 1, unit_size), dtype=jnp.float32)

    out = jax.jit(self_routing_2d)(x, W1, W2, b2)
    jax.block_until_ready(out)

    ref = self_routing_2d_ref(x, W1, W2, b2)
    assert out.shape == (B, num_units, unit_size)
    max_err = float(jnp.max(jnp.abs(out - ref)))
    # Tolerance covers the approx-reciprocal and summation-order differences;
    # a routing/math bug would be orders of magnitude larger.
    assert jnp.allclose(out, ref, atol=5e-3, rtol=1e-2), f"max abs err {max_err}"

    print("KERNEL_OK")
</pallas_src>

<mosaic_0001>
module attributes {stable_mosaic.version = 11 : i64} {
  func.func @_self_routing_kernel(%arg0: i32, %arg1: memref<1x8x256xf32, #tpu.memory_space<vmem>>, %arg2: memref<8x160xf32, #tpu.memory_space<vmem>>, %arg3: memref<1x1x160xf32, #tpu.memory_space<vmem>>) attributes {dimension_semantics = [#tpu.dimension_semantics<parallel>], iteration_bounds = array<i64: 2>, scalar_prefetch = 0 : i64, scratch_operands = 0 : i64, tpu.core_type = #tpu.core_type<tc>, window_params = [{transform_indices = @transform_0, window_bounds = array<i64: 1, 8, 256>}, {pipeline_mode = #tpu.pipeline_mode<synchronous>, transform_indices = @transform_1, window_bounds = array<i64: 8, 160>}, {transform_indices = @transform_2, window_bounds = array<i64: 1, 1, 160>}]} {
    %c0 = arith.constant 0 : index
    %c0_0 = arith.constant 0 : index
    %c0_1 = arith.constant 0 : index
    %0 = vector.load %arg1[%c0, %c0_0, %c0_1] : memref<1x8x256xf32, #tpu.memory_space<vmem>>, vector<1x8x256xf32>
    %1 = arith.mulf %0, %0 : vector<1x8x256xf32>
    %cst = arith.constant dense<0.000000e+00> : vector<1x256xf32>
    %2 = vector.multi_reduction <add>, %1, %cst [1] : vector<1x8x256xf32> to vector<1x256xf32>
    %3 = vector.shape_cast %2 : vector<1x256xf32> to vector<1x1x256xf32>
    %4 = math.sqrt %3 : vector<1x1x256xf32>
    %cst_2 = arith.constant dense<0.000000e+00> : vector<1x1xf32>
    %5 = vector.multi_reduction <add>, %4, %cst_2 [2] : vector<1x1x256xf32> to vector<1x1xf32>
    %6 = vector.shape_cast %5 : vector<1x1xf32> to vector<1x1x1xf32>
    %7 = tpu.reciprocal %6 {approx = true} : vector<1x1x1xf32> -> vector<1x1x1xf32>
    %8 = vector.broadcast %7 : vector<1x1x1xf32> to vector<1x1x256xf32>
    %9 = arith.mulf %4, %8 : vector<1x1x256xf32>
    %10 = vector.broadcast %9 : vector<1x1x256xf32> to vector<1x8x256xf32>
    %11 = arith.mulf %0, %10 : vector<1x8x256xf32>
    %cst_3 = arith.constant dense<0.000000e+00> : vector<1x8xf32>
    %12 = vector.multi_reduction <add>, %11, %cst_3 [2] : vector<1x8x256xf32> to vector<1x8xf32>
    %c0_4 = arith.constant 0 : index
    %c0_5 = arith.constant 0 : index
    %13 = vector.load %arg2[%c0_4, %c0_5] : memref<8x160xf32, #tpu.memory_space<vmem>>, vector<8x160xf32>
    %cst_6 = arith.constant dense<0.000000e+00> : vector<1x160xf32>
    %14 = tpu.matmul %12, %13, %cst_6 {dimension_numbers = #tpu.dot_dimension_numbers<[1], [0], [0], [1], [0, 0, 1, 1], [], []>} : vector<1x8xf32>, vector<8x160xf32>, vector<1x160xf32> -> vector<1x160xf32>
    %c0_7 = arith.constant 0 : index
    %c0_8 = arith.constant 0 : index
    %c0_9 = arith.constant 0 : index
    %15 = vector.load %arg3[%c0_7, %c0_8, %c0_9] : memref<1x1x160xf32, #tpu.memory_space<vmem>>, vector<1x1x160xf32>
    %16 = vector.shape_cast %15 : vector<1x1x160xf32> to vector<1x160xf32>
    %17 = vector.shape_cast %14 : vector<1x160xf32> to vector<1x1x160xf32>
    tpu.vector_store %arg3[%c0_7, %c0_8, %c0_9], %17 {strides = array<i32>} : memref<1x1x160xf32, #tpu.memory_space<vmem>>, vector<1x1x160xf32>,
    return
  }
  func.func @transform_0(%arg0: i32) -> (i32, i32, i32) {
    %c0_i32 = arith.constant 0 : i32
    %c0_i32_0 = arith.constant 0 : i32
    %c0_i32_1 = arith.constant 0 : i32
    return %arg0, %c0_i32, %c0_i32_0 : i32, i32, i32
  }
  func.func @transform_1(%arg0: i32) -> (i32, i32) {
    %c0_i32 = arith.constant 0 : i32
    %c0_i32_0 = arith.constant 0 : i32
    %c0_i32_1 = arith.constant 0 : i32
    return %c0_i32, %c0_i32_0 : i32, i32
  }
  func.func @transform_2(%arg0: i32) -> (i32, i32, i32) {
    %c0_i32 = arith.constant 0 : i32
    %c0_i32_0 = arith.constant 0 : i32
    %c0_i32_1 = arith.constant 0 : i32
    return %arg0, %c0_i32, %c0_i32_0 : i32, i32, i32
  }
}

</mosaic_0001>

<llo_original>
// kernel: self_routing_2d.1
$region0: #{self_routing_2d.1}
  #allocation0 [shape = 'u32[]', space=smem, size = 0x4, offset = 0x4, fixed_abs, tag = 'smem constant byte address 0x4 - core index']
  #allocation1 [shape = 'u32[144,128]{1,0:T(1,128)}', space=vmem, size = 0x12000, scoped, tag = 'internal scratch']
  %s0 = inlined_call_operand.vmem [shape: f32[2,8,256], index: 0, kind: input, shape index: {}]
  %s1 = inlined_call_operand.vmem [shape: f32[8,160], index: 1, kind: input, shape index: {}]
  %s2 = inlined_call_operand.vmem [shape: f32[2,1,160], index: 2, kind: output, shape index: {}]
  %s3 = sld [smem:[#allocation0]]
  $region41: #{self_routing_2d.1} parent=0
    _
  %s5 = ssub.s32 1, %s3
  %s6 = scalar_select 0, %s5, %s3
  loop: start=0, step=1, limit=4
  $region2: #{self_routing_2d.1} parent=0 // loop_pre_header
    _
  $region3: #{self_routing_2d.1} parent=0 // loop_header
    %s8 = sphi 0, %s12
    %p9 = scmp.ge.s32.totalorder %s8, 4
    %s18 = sphi 0, %s20
    %s21 = sphi 0, %s18
    %s22 = sphi 0, %s21
    %s38 = sphi 0, %s22
    %s42 = sphi 0, %s42
    %s44 = sphi 0, %s42
    %s45 = sphi 0, %s44
    %s59 = sphi 0, %s45
    %s65 = sphi 0, %s67
    %s68 = sphi 0, %s65
    %s69 = sphi 0, %s68
    %s85 = sphi 0, %s69
  $region4: #{self_routing_2d.1} parent=0 // loop_header_branch
    %11 = sbr.rel (%p9) target = $region8
  $region5: #{self_routing_2d.1} parent=0 // loop_body
    %s13 = ssub.s32 %s8, 1
    %s14 = ssub.s32 %s8, 2
    %s15 = sadd.s32 %s8, 1
    %s16 = ssub.s32 %s8, %s15
    %p17 = scmp.eq.s32.totalorder %s16, 0
    %s19 = sadd.s32 %s18, 1
    %s20 = scalar_select %p17, %s18, %s19
    %p23 = pneg %p17
    %p24 = scmp.eq.s32.totalorder %s8, 1
    %p25 = por %p23, %p24
    %p26 = scmp.ne.s32.totalorder %s18, %s21
    %p27 = scmp.eq.s32.totalorder %s8, 0
    %p28 = por %p26, %p27
    %p29 = scmp.ne.s32.totalorder %s18, %s21
    %p30 = scmp.eq.s32.totalorder %s13, 1
    %p31 = por %p29, %p30
    %p32 = scmp.ne.s32.totalorder %s21, %s22
    %p33 = scmp.eq.s32.totalorder %s13, 0
    %p34 = por %p32, %p33
    %p35 = scmp.ne.s32.totalorder %s21, %s22
    %p36 = scmp.eq.s32.totalorder %s14, 1
    %p37 = por %p35, %p36
    %p39 = scmp.ne.s32.totalorder %s22, %s38
    %p40 = scmp.eq.s32.totalorder %s14, 0
    %p41 = por %p39, %p40
    %s43 = sadd.s32 %s42, 1
    %p46 = scmp.eq.s32.totalorder %s8, 1
    %p47 = scmp.ne.s32.totalorder %s42, %s44
    %p48 = scmp.eq.s32.totalorder %s8, 0
    %p49 = por %p47, %p48
    %p50 = scmp.ne.s32.totalorder %s42, %s44
    %p51 = scmp.eq.s32.totalorder %s13, 1
    %p52 = por %p50, %p51
    %p53 = scmp.ne.s32.totalorder %s44, %s45
    %p54 = scmp.eq.s32.totalorder %s13, 0
    %p55 = por %p53, %p54
    %p56 = scmp.ne.s32.totalorder %s44, %s45
    %p57 = scmp.eq.s32.totalorder %s14, 1
    %p58 = por %p56, %p57
    %p60 = scmp.ne.s32.totalorder %s45, %s59
    %p61 = scmp.eq.s32.totalorder %s14, 0
    %p62 = por %p60, %p61
    %s63 = ssub.s32 %s8, %s15
    %p64 = scmp.eq.s32.totalorder %s63, 0
    %s66 = sadd.s32 %s65, 1
    %s67 = scalar_select %p64, %s65, %s66
    %p70 = pneg %p64
    %p71 = scmp.eq.s32.totalorder %s8, 1
    %p72 = por %p70, %p71
    %p73 = scmp.ne.s32.totalorder %s65, %s68
    %p74 = scmp.eq.s32.totalorder %s8, 0
    %p75 = por %p73, %p74
    %p76 = scmp.ne.s32.totalorder %s65, %s68
    %p77 = scmp.eq.s32.totalorder %s13, 1
    %p78 = por %p76, %p77
    %p79 = scmp.ne.s32.totalorder %s68, %s69
    %p80 = scmp.eq.s32.totalorder %s13, 0
    %p81 = por %p79, %p80
    %p82 = scmp.ne.s32.totalorder %s68, %s69
    %p83 = scmp.eq.s32.totalorder %s14, 1
    %p84 = por %p82, %p83
    %p86 = scmp.ne.s32.totalorder %s69, %s85
    %p87 = scmp.eq.s32.totalorder %s14, 0
    %p88 = por %p86, %p87
    %p89 = scmp.le.s32.totalorder 1, %s8
    %p90 = scmp.lt.s32.totalorder %s8, 3
    %p91 = pnand %p89, %p90
    %p92 = pneg %p91
    // Predicated region
    $region9: #{self_routing_2d.1} parent=5 // pred_check
      _
    $region10: #{self_routing_2d.1} parent=5 // pred_check_branch
      %94 = sbr.rel (%p91) target = $region12
    $region11: #{self_routing_2d.1} parent=5 // pred_region
      %s95 = ssub.s32 %s8, 1
      // Predicated region
      $region13: #{self_routing_2d.1} parent=11 // pred_check
        %p96 = pneg %p55
      $region14: #{self_routing_2d.1} parent=11 // pred_check_branch
        %98 = sbr.rel (%p96) target = $region16
      $region15: #{self_routing_2d.1} parent=11 // pred_region
        _
      $region16: #{self_routing_2d.1} parent=11 // pred_fallthru
        _
    $region12: #{self_routing_2d.1} parent=5 // pred_fallthru
      _
    %p99 = scmp.lt.s32.totalorder %s8, 2
    // Predicated region
    $region17: #{self_routing_2d.1} parent=5 // pred_check
      %p100 = pneg %p99
    $region18: #{self_routing_2d.1} parent=5 // pred_check_branch
      %102 = sbr.rel (%p100) target = $region20
    $region19: #{self_routing_2d.1} parent=5 // pred_region
      // Predicated region
      $region21: #{self_routing_2d.1} parent=19 // pred_check
        %p103 = pneg %p28
      $region22: #{self_routing_2d.1} parent=19 // pred_check_branch
        %105 = sbr.rel (%p103) target = $region24
      $region23: #{self_routing_2d.1} parent=19 // pred_region
        %p106 = scmp.lt.s32.totalorder %s8, 1
        %s107 = scalar_select %p106, %s8, 1
        %s108 = smul.addr %s107, 2
        %s109 = smul.addr %s108, 8
        %s110 = scalar_lea.vmem %s0, %s109
      $region24: #{self_routing_2d.1} parent=19 // pred_fallthru
        _
    $region20: #{self_routing_2d.1} parent=5 // pred_fallthru
      _
    %p111 = scmp.le.s32.totalorder 1, %s8
    %p112 = scmp.lt.s32.totalorder %s8, 3
    %p113 = pnand %p111, %p112
    %p114 = pneg %p113
    // Predicated region
    $region25: #{self_routing_2d.1} parent=5 // pred_check
      _
    $region26: #{self_routing_2d.1} parent=5 // pred_check_branch
      %116 = sbr.rel (%p113) target = $region28
    $region27: #{self_routing_2d.1} parent=5 // pred_region
      %s117 = ssub.s32 %s8, 1
      %p118 = scmp.lt.s32.totalorder %s13, 1
      %s119 = scalar_select %p118, %s13, 1
      %s120 = smul.addr %s119, 2
      %s121 = smul.addr %s120, 8
      %s122 = scalar_lea.vmem %s0, %s121
      %p123 = pneg %p34
      %p124 = pneg %p31
      %p125 = pneg %p55
      %p126 = pneg %p52
      %p127 = pneg %p81
      %p128 = pneg %p78
      %p129 = scmp.lt.s32.totalorder %s13, 1
      %s130 = scalar_select %p129, %s13, 1
      %s131 = smul.addr %s130, 2
      %s132 = scalar_lea.vmem %s2, %s131
      %p133 = scmp.lt.s32.totalorder %s13, 1
      %s134 = scalar_select %p133, %s13, 1
      %s135 = smul.addr %s134, 2
      %s136 = smul.addr %s135, 8
      %s137 = scalar_lea.vmem %s0, %s136
      %p138 = scmp.lt.s32.totalorder %s13, 1
      %s139 = scalar_select %p138, %s13, 1
      %s140 = smul.addr %s139, 2
      %s141 = scalar_lea.vmem %s2, %s140
      %v142 = vld [vmem:[%s137] sm:$0xff]
      %v143 = vld [vmem:[%s137 + $0x8] sm:$0xff]
      %v144 = vmul.f32 %v142, %v142
      %v145 = vmul.f32 %v143, %v143
      %v146 = vrot.slane %v144, 4
      %v147 = vadd.f32 %v144, %v146
      %v148 = vrot.slane %v147, 2
      %v149 = vadd.f32 %v147, %v148
      %v150 = vrot.slane %v149, 1
      %v151 = vadd.f32 %v149, %v150
      %v152 = vrot.slane %v145, 4
      %v153 = vadd.f32 %v145, %v152
      %v154 = vrot.slane %v153, 2
      %v155 = vadd.f32 %v153, %v154
      %v156 = vrot.slane %v155, 1
      %v157 = vadd.f32 %v155, %v156
      %v158 = vrsqrt.pop %v151
      %v159 = vmul.f32 %v151, %v158
      %vm160 = vcmp.eq.f32.partialorder %v151, inf
      %v161 = vsel %vm160, %v151, %v159
      %vm162 = vcmp.eq.f32.partialorder %v151, 0.0
      %v163 = vand.u32 %v151, 2147483648
      %v164 = vsel %vm162, %v163, %v161
      %v165 = vrsqrt.pop %v157
      %v166 = vmul.f32 %v157, %v165
      %vm167 = vcmp.eq.f32.partialorder %v157, inf
      %v168 = vsel %vm167, %v157, %v166
      %vm169 = vcmp.eq.f32.partialorder %v157, 0.0
      %v170 = vand.u32 %v157, 2147483648
      %v171 = vsel %vm169, %v170, %v168
      %v172 = vadd.f32 %v164, %v171
      %173 = vadd.xlane.f32.xlu0 %v172
      %v174 = vpop.xlane.xlu0 %173
      %v175 = vrcp.pop %v174
      %v176 = vmul.f32 %v164, %v175
      %v177 = vmul.f32 %v171, %v175
      %v178 = vmul.f32 %v142, %v176
      %v179 = vmul.f32 %v143, %v177
      %v180 = vadd.f32 %v178, %v179
      %181 = vadd.xlane.f32.xlu0 %v180
      %v182 = vpop.xlane.xlu0 %181
      %v183 = vld [vmem:[%s1] sm:$0xff]
      %v184 = vld [vmem:[%s1 + $0x8] sm:$0xff]
      %v186 = vlaneseq
      %v187 = vand.u32 %v186, 127
      %v188 = vlaneseq
      %v189 = vshrl.u32 %v188, 7
      %v190 = vsub.s32 %v187, %v189
      %v191 = vrot.slane %v182, %v190
      %vm192 = vcmask 64512
      %v193 = vsel %vm192, %v191, 0
      %195 = vmatprep.subr.mxu0 %v184
      %196 = vmatpush1.msra.mxu0 %v183
      %197 = vmatprep.subr.mxu0 0.0
      %198 = vmatpush1.msra.mxu0 0.0
      %199 = vmatprep.subr.mxu0 0.0
      %200 = vmatpush1.msra.mxu0 0.0
      %201 = vmatprep.subr.mxu0 0.0
      %202 = vmatpush1.msra.mxu0 0.0
      %203 = vmatprep.subr.mxu0 0.0
      %204 = vmatpush1.msra.mxu0 0.0
      %205 = vmatprep.subr.mxu0 0.0
      %206 = vmatpush1.msra.mxu0 0.0
      %207 = vmatprep.subr.mxu0 0.0
      %208 = vmatpush1.msra.mxu0 0.0
      %209 = vmatprep.subr.mxu0 0.0
      %210 = vmatpush1.msra.mxu0 0.0
      %211 = vmatprep.subr.mxu0 0.0
      %212 = vmatpush1.msra.mxu0 0.0
      %213 = vmatprep.subr.mxu0 0.0
      %214 = vmatpush1.msra.mxu0 0.0
      %215 = vmatprep.subr.mxu0 0.0
      %216 = vmatpush1.msra.mxu0 0.0
      %217 = vmatprep.subr.mxu0 0.0
      %218 = vmatpush1.msra.mxu0 0.0
      %219 = vmatprep.subr.mxu0 0.0
      %220 = vmatpush1.msra.mxu0 0.0
      %221 = vmatprep.subr.mxu0 0.0
      %222 = vmatpush1.msra.mxu0 0.0
      %223 = vmatprep.subr.mxu0 0.0
      %224 = vmatpush1.msra.mxu0 0.0
      %225 = vmatprep.subr.mxu0 0.0
      %226 = vmatpush1.msra.mxu0 0.0
      %227 = vmatprep.subr.mxu0 0.0
      %228 = vmatpush1.msra.mxu0 0.0
      %229 = vmatprep.subr.mxu0 0.0
      %230 = vmatpush1.msra.mxu0 0.0
      %231 = vmatprep.subr.mxu0 0.0
      %232 = vmatpush1.msra.mxu0 0.0
      %233 = vmatprep.subr.mxu0 0.0
      %234 = vmatpush1.msra.mxu0 0.0
      %235 = vmatprep.subr.mxu0 0.0
      %236 = vmatpush1.msra.mxu0 0.0
      %237 = vmatprep.subr.mxu0 0.0
      %238 = vmatpush1.msra.mxu0 0.0
      %239 = vmatprep.subr.mxu0 0.0
      %240 = vmatpush1.msra.mxu0 0.0
      %241 = vmatprep.subr.mxu0 0.0
      %242 = vmatpush1.msra.mxu0 0.0
      %243 = vmatprep.subr.mxu0 0.0
      %244 = vmatpush1.msra.mxu0 0.0
      %245 = vmatprep.subr.mxu0 0.0
      %246 = vmatpush1.msra.mxu0 0.0
      %247 = vmatprep.subr.mxu0 0.0
      %248 = vmatpush1.msra.mxu0 0.0
      %249 = vmatprep.subr.mxu0 0.0
      %250 = vmatpush1.msra.mxu0 0.0
      %251 = vmatprep.subr.mxu0 0.0
      %252 = vmatpush1.msra.mxu0 0.0
      %253 = vmatprep.subr.mxu0 0.0
      %254 = vmatpush1.msra.mxu0 0.0
      %255 = vmatprep.subr.mxu0 0.0
      %256 = vmatpush1.msra.mxu0 0.0
      %257 = vmatprep.subr.mxu0 0.0
      %258 = vmatpush1.msra.mxu0 0.0
      %259 = vmatprep.mubr.f32.mxu0 0.0
      %260 = vmatmul.mubr.f32.gmra.mrb[0].mxu0 %v193
      %v261 = vpop.f32.mrb[0].mxu0
      %v262 = vadd.f32 0.0, %v261
      %v263 = vpop.f32.mrb[0].mxu0
      %v264 = vadd.f32 0.0, %v263
      %265 = vdwg.mxu0
      %v268 = vcombine.low %v262, %v264
      %v270 = vunpack.c.l.s4 1966171168
      %v271 = vunpack.c.0.s8 %v270
      %v272 = vlaneseq
      %v273 = vshrl.u32 %v272, 7
      %v274 = vsub.s32 %v271, %v273
      %v275 = vrot.slane %v268, %v274
      %v277 = vunpack.c.l.s4 1966171168
      %v278 = vunpack.c.0.s8 %v277
      %v279 = vlaneseq
      %v280 = vshrl.u32 %v279, 7
      %v281 = vsub.s32 %v278, %v280
      %v282 = vrot.slane %v275, %v281
      %v284 = vlaneseq
      %vm285 = vcmp.ge.s32.totalorder %v284, 0
      %vm286 = vcmp.lt.s32.totalorder %v284, 160
      %vm287 = vmand %vm285, %vm286
      %288 = vst.msk [vmem:[%s141] sm:$0x3] %vm287, %v282
      %p289 = scmp.lt.s32.totalorder %s13, 1
      %s290 = scalar_select %p289, %s13, 1
      %s291 = smul.addr %s290, 2
      %s292 = scalar_lea.vmem %s2, %s291
      // Predicated region
      $region29: #{self_routing_2d.1} parent=27 // pred_check
        %p293 = pneg %p78
      $region30: #{self_routing_2d.1} parent=27 // pred_check_branch
        %295 = sbr.rel (%p293) target = $region32
      $region31: #{self_routing_2d.1} parent=27 // pred_region
        _
      $region32: #{self_routing_2d.1} parent=27 // pred_fallthru
        _
    $region28: #{self_routing_2d.1} parent=5 // pred_fallthru
      _
    %p296 = scmp.le.s32.totalorder 2, %s8
    // Predicated region
    $region33: #{self_routing_2d.1} parent=5 // pred_check
      %p297 = pneg %p296
    $region34: #{self_routing_2d.1} parent=5 // pred_check_branch
      %299 = sbr.rel (%p297) target = $region36
    $region35: #{self_routing_2d.1} parent=5 // pred_region
      %s300 = ssub.s32 %s8, 2
      // Predicated region
      $region37: #{self_routing_2d.1} parent=35 // pred_check
        %p301 = pneg %p84
      $region38: #{self_routing_2d.1} parent=35 // pred_check_branch
        %303 = sbr.rel (%p301) target = $region40
      $region39: #{self_routing_2d.1} parent=35 // pred_region
        %p304 = scmp.lt.s32.totalorder %s14, 1
        %s305 = scalar_select %p304, %s14, 1
        %s306 = smul.addr %s305, 2
        %s307 = scalar_lea.vmem %s2, %s306
      $region40: #{self_routing_2d.1} parent=35 // pred_fallthru
        _
    $region36: #{self_routing_2d.1} parent=5 // pred_fallthru
      _
  $region6: #{self_routing_2d.1} parent=0 // loop_footer
    %s12 = sadd.s32 1, %s8
  $region7: #{self_routing_2d.1} parent=0 // loop_footer_branch
    %7 = sbr.rel target = $region3
  $region8: #{self_routing_2d.1} parent=0 // loop_exit
    _

</llo_original>
